<compile_context>
chip_gen: v7x
topology: tpu7x:2x2x1
jax: 0.10.0
libtpu: 0.0.40
codegen_flags: <defaults>
</compile_context>

<pallas_src>
import jax
import jax.numpy as jnp
from jax.experimental import pallas as pl
from jax.experimental.pallas import tpu as pltpu


def transition_kernel(x_ref, ss_ref, w_ref, o_ref):
    # x_ref : (4, TM, Cin)   compute dtype; leading dim = 2x2 pool-window position
    # ss_ref: (2, 1, Cin)    f32; row 0 = folded BN scale, row 1 = folded BN shift
    # w_ref : (Cin, CoutP)   compute dtype; 1x1-conv weight with 1/4 pool factor folded in
    # o_ref : (TM, CoutP)
    ss = ss_ref[...]                                    # (2, 1, Cin) f32, resident
    x = x_ref[...].astype(jnp.float32)                  # elementwise path in f32 (v5e has no bf16 VALU)

    # Eval-mode BN + ReLU on the VPU (per-channel scale/shift broadcast over lanes-major dims).
    z = jnp.maximum(x * ss[0:1] + ss[1:2], 0.0)         # (4, TM, Cin)

    # Sum the 4 pool-window positions: pure VPU adds over the leading dim,
    # lane-alignment-safe for any Cin.  The 1/4 factor lives in the weight.
    zsum = (z[0] + z[1]) + (z[2] + z[3])                 # (TM, Cin), f32

    # Single K = Cin matmul on the MXU; operands cast to the compute dtype
    # (bf16 on the hot path), f32 accumulation.
    o_ref[...] = jnp.dot(zsum.astype(w_ref.dtype), w_ref[...],
                         preferred_element_type=jnp.float32).astype(o_ref.dtype)


def _vmem_plan():
    """Per-generation (block budget, vmem_limit_bytes, max TM)."""
    kind = ""
    try:
        kind = jax.devices()[0].device_kind.lower()
    except Exception:
        pass
    if "v7" in kind:                       # 64 MiB physical VMEM, 2 TCs
        return 26 << 20, 36 << 20, 1024
    if "v6" in kind:                       # 128 MiB physical VMEM
        return 80 << 20, 96 << 20, 2048
    if "v5" in kind:                       # 128 MiB physical, 16 MiB default scoped
        return 48 << 20, 64 << 20, 1024
    return 24 << 20, 32 << 20, 1024        # unknown: conservative


def transition_forward(x_nchw, gamma, beta, running_mean, running_var, conv_w,
                       eps=1e-5, compute_dtype=jnp.bfloat16, out_dtype=None):
    N, Cin, H, W = x_nchw.shape
    Cout = conv_w.shape[0]
    Ho, Wo = H // 2, W // 2
    M = N * Ho * Wo
    out_dtype = x_nchw.dtype if out_dtype is None else out_dtype

    x_item = jnp.dtype(compute_dtype).itemsize
    o_item = jnp.dtype(out_dtype).itemsize

    # Match PyTorch avg_pool2d(2) floor behavior for odd spatial dims (no-op if even).
    x = x_nchw[:, :, :2 * Ho, :2 * Wo]

    # Fold eval-mode BatchNorm into per-channel scale/shift.  Kept in f32 for
    # accuracy even on the bf16 path (review correctness note).
    scale = (gamma.astype(jnp.float32) /
             jnp.sqrt(running_var.astype(jnp.float32) + eps))
    shift = beta.astype(jnp.float32) - running_mean.astype(jnp.float32) * scale
    ss = jnp.stack([scale, shift]).reshape(2, 1, Cin)                # (2, 1, Cin) f32

    # Single layout pass: NCHW -> (dh, dw, N, Ho, Wo, Cin) -> (4, M, Cin).
    # The bf16 cast fuses into the same copy, and allow_input_fusion below lets
    # XLA fuse the whole producer into the pallas_call so it need not be
    # materialized in HBM at all.  Trailing reshapes only merge adjacent dims.
    x = x.astype(compute_dtype)
    x = x.reshape(N, Cin, Ho, 2, Wo, 2)
    x = jnp.transpose(x, (3, 5, 0, 2, 4, 1))                          # (2, 2, N, Ho, Wo, Cin)
    x = x.reshape(4, M, Cin)                                          # window-major leading axis

    # PyTorch conv weight (Cout, Cin, 1, 1) -> (Cin, Cout); fold 1/4 avg-pool factor.
    w = (conv_w.reshape(Cout, Cin).T.astype(jnp.float32) * 0.25).astype(compute_dtype)
    # Lane-dense output padding only when it is cheap; for small Cout the true
    # extent (masked stores) beats large write amplification + a wrapper slice.
    if Cout > 128 and Cout % 128 != 0:
        cout_p = ((Cout + 127) // 128) * 128
        w = jnp.pad(w, ((0, 0), (0, cout_p - Cout)))                  # (Cin, CoutP)
    else:
        cout_p = Cout

    # Generation-aware TM: biggest block that keeps double-buffered x/out blocks
    # plus the resident weight and scale/shift under the per-chip budget, rounded
    # to a multiple of 256 (MXU/DMA friendly), with a mild preference for an even
    # number of M tiles (v7x shards the parallel grid across 2 TensorCores).
    budget, vmem_limit, tm_max = _vmem_plan()
    resident = 2 * Cin * cout_p * x_item + 2 * 2 * Cin * 4            # weight + scale/shift (dbl-buffered)
    per_row = 2 * (4 * Cin * x_item + cout_p * o_item)                # dbl-buffered x and out blocks
    cap = max(8, (budget - resident) // per_row)
    cap = min(cap, tm_max)
    if cap >= M:
        TM = M
    else:
        TM = max(256, (cap // 256) * 256) if cap >= 256 else max(8, (cap // 8) * 8)
        if (TM > 256 and pl.cdiv(M, TM) % 2 == 1
                and pl.cdiv(M, TM - 256) % 2 == 0):
            TM -= 256
    TM = min(TM, M)

    grid = (pl.cdiv(M, TM),)

    cost = pl.CostEstimate(
        flops=2 * M * Cin * cout_p + 12 * M * Cin,
        transcendentals=0,
        bytes_accessed=4 * M * Cin * x_item + Cin * cout_p * x_item
                       + M * cout_p * o_item + 2 * Cin * 4)

    out = pl.pallas_call(
        transition_kernel,
        out_shape=jax.ShapeDtypeStruct((M, cout_p), out_dtype),
        grid_spec=pltpu.PrefetchScalarGridSpec(
            num_scalar_prefetch=0,
            grid=grid,
            in_specs=[
                pl.BlockSpec((4, TM, Cin), lambda m: (0, m, 0)),
                pl.BlockSpec((2, 1, Cin), lambda m: (0, 0, 0)),    # resident BN scale/shift (f32)
                pl.BlockSpec((Cin, cout_p), lambda m: (0, 0)),     # resident weight
            ],
            out_specs=pl.BlockSpec((TM, cout_p), lambda m: (m, 0)),
        ),
        compiler_params=pltpu.CompilerParams(
            dimension_semantics=("parallel",),
            vmem_limit_bytes=vmem_limit,
            # Let XLA fuse the transpose/cast producing x into the custom call
            # so the permuted activation need not round-trip HBM.
            allow_input_fusion=[True, False, False],
        ),
        cost_estimate=cost,
    )(x, ss, w)

    if cout_p != Cout:
        out = out[:, :Cout]
    # Back to the module's NCHW contract.  If the consumer can take NHWC,
    # drop this transpose and use out.reshape(N, Ho, Wo, Cout) directly.
    out = out.reshape(N, Ho, Wo, Cout)
    out = jnp.transpose(out, (0, 3, 1, 2))                            # (N, Cout, Ho, Wo)
    return out


def transition_reference(x_nchw, gamma, beta, running_mean, running_var, conv_w,
                         eps=1e-5):
    # Plain-JAX reference matching PyTorch (eval-mode BN).
    scale = gamma / jnp.sqrt(running_var + eps)
    shift = beta - running_mean * scale
    z = x_nchw * scale[None, :, None, None] + shift[None, :, None, None]
    z = jnp.maximum(z, 0.0)
    w = conv_w.reshape(conv_w.shape[0], conv_w.shape[1])              # (Cout, Cin)
    y = jnp.einsum("nchw,oc->nohw", z, w)                             # 1x1 conv, no bias
    N, Cout, H, W = y.shape
    y = y.reshape(N, Cout, H // 2, 2, W // 2, 2).mean(axis=(3, 5))    # avg_pool2d(2)
    return y


if __name__ == "__main__":
    key = jax.random.PRNGKey(0)
    k_x, k_g, k_b, k_m, k_v, k_w = jax.random.split(key, 6)

    N, Cin, H, W = 2, 4, 16, 16
    Cout = 8

    x = jax.random.normal(k_x, (N, Cin, H, W), dtype=jnp.float32)
    gamma = 1.0 + 0.1 * jax.random.normal(k_g, (Cin,), dtype=jnp.float32)
    beta = 0.1 * jax.random.normal(k_b, (Cin,), dtype=jnp.float32)
    running_mean = 0.1 * jax.random.normal(k_m, (Cin,), dtype=jnp.float32)
    running_var = jnp.abs(jax.random.normal(k_v, (Cin,), dtype=jnp.float32)) + 0.5
    conv_w = jax.random.normal(k_w, (Cout, Cin, 1, 1), dtype=jnp.float32) * 0.1

    ref = transition_reference(x, gamma, beta, running_mean, running_var, conv_w)

    # f32 path: matches the reference at tight tolerance.
    out_f32 = transition_forward(x, gamma, beta, running_mean, running_var, conv_w,
                                 compute_dtype=jnp.float32)
    out_f32 = jax.block_until_ready(out_f32)
    assert out_f32.shape == (N, Cout, H // 2, W // 2), out_f32.shape
    assert jnp.allclose(out_f32, ref, atol=1e-5, rtol=1e-5), \
        float(jnp.max(jnp.abs(out_f32 - ref)))

    # bf16 hot path (default): activations/weight in bf16, BN/ReLU and
    # accumulation in f32; verified at bf16-appropriate tolerance.
    out_bf16 = transition_forward(x, gamma, beta, running_mean, running_var, conv_w)
    out_bf16 = jax.block_until_ready(out_bf16)
    assert out_bf16.shape == (N, Cout, H // 2, W // 2), out_bf16.shape
    assert jnp.allclose(out_bf16, ref, atol=1e-1, rtol=1e-1), \
        float(jnp.max(jnp.abs(out_bf16 - ref)))

    print("KERNEL_OK")
</pallas_src>

<mosaic_0001>
module attributes {stable_mosaic.version = 11 : i64} {
  func.func @transition_kernel(%arg0: i32, %arg1: memref<4x128x4xf32, #tpu.memory_space<vmem>>, %arg2: memref<2x1x4xf32, #tpu.memory_space<vmem>>, %arg3: memref<4x8xf32, #tpu.memory_space<vmem>>, %arg4: memref<128x8xf32, #tpu.memory_space<vmem>>) attributes {dimension_semantics = [#tpu.dimension_semantics<parallel>], iteration_bounds = array<i64: 1>, scalar_prefetch = 0 : i64, scratch_operands = 0 : i64, tpu.core_type = #tpu.core_type<tc>, window_params = [{transform_indices = @transform_0, window_bounds = array<i64: 4, 128, 4>}, {pipeline_mode = #tpu.pipeline_mode<synchronous>, transform_indices = @transform_1, window_bounds = array<i64: 2, 1, 4>}, {pipeline_mode = #tpu.pipeline_mode<synchronous>, transform_indices = @transform_2, window_bounds = array<i64: 4, 8>}, {transform_indices = @transform_3, window_bounds = array<i64: 128, 8>}]} {
    %c0 = arith.constant 0 : index
    %c0_0 = arith.constant 0 : index
    %c0_1 = arith.constant 0 : index
    %0 = vector.load %arg2[%c0, %c0_0, %c0_1] : memref<2x1x4xf32, #tpu.memory_space<vmem>>, vector<2x1x4xf32>
    %c0_2 = arith.constant 0 : index
    %c0_3 = arith.constant 0 : index
    %c0_4 = arith.constant 0 : index
    %1 = vector.load %arg1[%c0_2, %c0_3, %c0_4] : memref<4x128x4xf32, #tpu.memory_space<vmem>>, vector<4x128x4xf32>
    %2 = vector.extract_strided_slice %0 {offsets = [0, 0, 0], sizes = [1, 1, 4], strides = [1, 1, 1]} : vector<2x1x4xf32> to vector<1x1x4xf32>
    %3 = vector.broadcast %2 : vector<1x1x4xf32> to vector<4x128x4xf32>
    %4 = arith.mulf %1, %3 : vector<4x128x4xf32>
    %5 = vector.extract_strided_slice %0 {offsets = [1, 0, 0], sizes = [1, 1, 4], strides = [1, 1, 1]} : vector<2x1x4xf32> to vector<1x1x4xf32>
    %6 = vector.broadcast %5 : vector<1x1x4xf32> to vector<4x128x4xf32>
    %7 = arith.addf %4, %6 : vector<4x128x4xf32>
    %cst = arith.constant 0.000000e+00 : f32
    %8 = vector.broadcast %cst : f32 to vector<4x128x4xf32>
    %9 = arith.maximumf %7, %8 : vector<4x128x4xf32>
    %10 = vector.extract_strided_slice %9 {offsets = [0, 0, 0], sizes = [1, 128, 4], strides = [1, 1, 1]} : vector<4x128x4xf32> to vector<1x128x4xf32>
    %11 = vector.shape_cast %10 : vector<1x128x4xf32> to vector<128x4xf32>
    %12 = vector.extract_strided_slice %9 {offsets = [1, 0, 0], sizes = [1, 128, 4], strides = [1, 1, 1]} : vector<4x128x4xf32> to vector<1x128x4xf32>
    %13 = vector.shape_cast %12 : vector<1x128x4xf32> to vector<128x4xf32>
    %14 = arith.addf %11, %13 : vector<128x4xf32>
    %15 = vector.extract_strided_slice %9 {offsets = [2, 0, 0], sizes = [1, 128, 4], strides = [1, 1, 1]} : vector<4x128x4xf32> to vector<1x128x4xf32>
    %16 = vector.shape_cast %15 : vector<1x128x4xf32> to vector<128x4xf32>
    %17 = vector.extract_strided_slice %9 {offsets = [3, 0, 0], sizes = [1, 128, 4], strides = [1, 1, 1]} : vector<4x128x4xf32> to vector<1x128x4xf32>
    %18 = vector.shape_cast %17 : vector<1x128x4xf32> to vector<128x4xf32>
    %19 = arith.addf %16, %18 : vector<128x4xf32>
    %20 = arith.addf %14, %19 : vector<128x4xf32>
    %c0_5 = arith.constant 0 : index
    %c0_6 = arith.constant 0 : index
    %21 = vector.load %arg3[%c0_5, %c0_6] : memref<4x8xf32, #tpu.memory_space<vmem>>, vector<4x8xf32>
    %cst_7 = arith.constant dense<0.000000e+00> : vector<128x8xf32>
    %22 = tpu.matmul %20, %21, %cst_7 {dimension_numbers = #tpu.dot_dimension_numbers<[1], [0], [0], [1], [0, 0, 1, 1], [], []>} : vector<128x4xf32>, vector<4x8xf32>, vector<128x8xf32> -> vector<128x8xf32>
    %c0_8 = arith.constant 0 : index
    %c0_9 = arith.constant 0 : index
    %23 = vector.load %arg4[%c0_8, %c0_9] : memref<128x8xf32, #tpu.memory_space<vmem>>, vector<128x8xf32>
    tpu.vector_store %arg4[%c0_8, %c0_9], %22 {strides = array<i32>} : memref<128x8xf32, #tpu.memory_space<vmem>>, vector<128x8xf32>,
    return
  }
  func.func @transform_0(%arg0: i32) -> (i32, i32, i32) {
    %c0_i32 = arith.constant 0 : i32
    %c0_i32_0 = arith.constant 0 : i32
    %c0_i32_1 = arith.constant 0 : i32
    return %c0_i32, %arg0, %c0_i32_0 : i32, i32, i32
  }
  func.func @transform_1(%arg0: i32) -> (i32, i32, i32) {
    %c0_i32 = arith.constant 0 : i32
    %c0_i32_0 = arith.constant 0 : i32
    %c0_i32_1 = arith.constant 0 : i32
    %c0_i32_2 = arith.constant 0 : i32
    return %c0_i32, %c0_i32_0, %c0_i32_1 : i32, i32, i32
  }
  func.func @transform_2(%arg0: i32) -> (i32, i32) {
    %c0_i32 = arith.constant 0 : i32
    %c0_i32_0 = arith.constant 0 : i32
    %c0_i32_1 = arith.constant 0 : i32
    return %c0_i32, %c0_i32_0 : i32, i32
  }
  func.func @transform_3(%arg0: i32) -> (i32, i32) {
    %c0_i32 = arith.constant 0 : i32
    %c0_i32_0 = arith.constant 0 : i32
    return %arg0, %c0_i32 : i32, i32
  }
}

</mosaic_0001>

<llo_original>
// kernel: tpu_custom_call.1
$region0: #{tpu_custom_call.1}
  #allocation0 [shape = 'u32[]', space=smem, size = 0x4, offset = 0x4, fixed_abs, tag = 'smem constant byte address 0x4 - core index']
  #allocation1 [shape = 'u32[144,128]{1,0:T(1,128)}', space=vmem, size = 0x12000, scoped, tag = 'internal scratch']
  %s0 = inlined_call_operand.vmem [shape: f32[4,128,4], index: 0, kind: input, shape index: {}]
  %s1 = inlined_call_operand.vmem [shape: f32[2,1,4], index: 1, kind: input, shape index: {}]
  %s2 = inlined_call_operand.vmem [shape: f32[4,8], index: 2, kind: input, shape index: {}]
  %s3 = inlined_call_operand.vmem [shape: f32[128,8], index: 3, kind: output, shape index: {}]
  %s4 = sld [smem:[#allocation0]]
  $region22: #{tpu_custom_call.1} parent=0
    _
  %s6 = ssub.s32 1, %s4
  %s7 = scalar_select 0, %s6, %s4
  // Predicated region
  $region2: #{tpu_custom_call.1} parent=0 // pred_check
    _
  $region3: #{tpu_custom_call.1} parent=0 // pred_check_branch
    %9 = sbr.rel (0) target = $region5
  $region4: #{tpu_custom_call.1} parent=0 // pred_region
    _
  $region5: #{tpu_custom_call.1} parent=0 // pred_fallthru
    _
  // Predicated region
  $region6: #{tpu_custom_call.1} parent=0 // pred_check
    _
  $region7: #{tpu_custom_call.1} parent=0 // pred_check_branch
    %11 = sbr.rel (0) target = $region9
  $region8: #{tpu_custom_call.1} parent=0 // pred_region
    _
  $region9: #{tpu_custom_call.1} parent=0 // pred_fallthru
    _
  // Predicated region
  $region10: #{tpu_custom_call.1} parent=0 // pred_check
    _
  $region11: #{tpu_custom_call.1} parent=0 // pred_check_branch
    %13 = sbr.rel (0) target = $region13
  $region12: #{tpu_custom_call.1} parent=0 // pred_region
    _
  $region13: #{tpu_custom_call.1} parent=0 // pred_fallthru
    _
  %v14 = vld [vmem:[%s1] sm:$0x1]
  %v15 = vld [vmem:[%s1 + $0x1] sm:$0x1]
  %v16 = vld [vmem:[%s0] sm:$0xff]
  %v17 = vld [vmem:[%s0 + $0x8] sm:$0xff]
  %v18 = vld [vmem:[%s0 + $0x10] sm:$0xff]
  %v19 = vld [vmem:[%s0 + $0x18] sm:$0xff]
  %v20 = vld [vmem:[%s0 + $0x20] sm:$0xff]
  %v21 = vld [vmem:[%s0 + $0x28] sm:$0xff]
  %v22 = vld [vmem:[%s0 + $0x30] sm:$0xff]
  %v23 = vld [vmem:[%s0 + $0x38] sm:$0xff]
  %v24 = vld [vmem:[%s0 + $0x40] sm:$0xff]
  %v25 = vld [vmem:[%s0 + $0x48] sm:$0xff]
  %v26 = vld [vmem:[%s0 + $0x50] sm:$0xff]
  %v27 = vld [vmem:[%s0 + $0x58] sm:$0xff]
  %v28 = vld [vmem:[%s0 + $0x60] sm:$0xff]
  %v29 = vld [vmem:[%s0 + $0x68] sm:$0xff]
  %v30 = vld [vmem:[%s0 + $0x70] sm:$0xff]
  %v31 = vld [vmem:[%s0 + $0x78] sm:$0xff]
  %v32 = vld [vmem:[%s0 + $0x80] sm:$0xff]
  %v33 = vld [vmem:[%s0 + $0x88] sm:$0xff]
  %v34 = vld [vmem:[%s0 + $0x90] sm:$0xff]
  %v35 = vld [vmem:[%s0 + $0x98] sm:$0xff]
  %v36 = vld [vmem:[%s0 + $0xa0] sm:$0xff]
  %v37 = vld [vmem:[%s0 + $0xa8] sm:$0xff]
  %v38 = vld [vmem:[%s0 + $0xb0] sm:$0xff]
  %v39 = vld [vmem:[%s0 + $0xb8] sm:$0xff]
  %v40 = vld [vmem:[%s0 + $0xc0] sm:$0xff]
  %v41 = vld [vmem:[%s0 + $0xc8] sm:$0xff]
  %v42 = vld [vmem:[%s0 + $0xd0] sm:$0xff]
  %v43 = vld [vmem:[%s0 + $0xd8] sm:$0xff]
  %v44 = vld [vmem:[%s0 + $0xe0] sm:$0xff]
  %v45 = vld [vmem:[%s0 + $0xe8] sm:$0xff]
  %v46 = vld [vmem:[%s0 + $0xf0] sm:$0xff]
  %v47 = vld [vmem:[%s0 + $0xf8] sm:$0xff]
  %v48 = vld [vmem:[%s0 + $0x100] sm:$0xff]
  %v49 = vld [vmem:[%s0 + $0x108] sm:$0xff]
  %v50 = vld [vmem:[%s0 + $0x110] sm:$0xff]
  %v51 = vld [vmem:[%s0 + $0x118] sm:$0xff]
  %v52 = vld [vmem:[%s0 + $0x120] sm:$0xff]
  %v53 = vld [vmem:[%s0 + $0x128] sm:$0xff]
  %v54 = vld [vmem:[%s0 + $0x130] sm:$0xff]
  %v55 = vld [vmem:[%s0 + $0x138] sm:$0xff]
  %v56 = vld [vmem:[%s0 + $0x140] sm:$0xff]
  %v57 = vld [vmem:[%s0 + $0x148] sm:$0xff]
  %v58 = vld [vmem:[%s0 + $0x150] sm:$0xff]
  %v59 = vld [vmem:[%s0 + $0x158] sm:$0xff]
  %v60 = vld [vmem:[%s0 + $0x160] sm:$0xff]
  %v61 = vld [vmem:[%s0 + $0x168] sm:$0xff]
  %v62 = vld [vmem:[%s0 + $0x170] sm:$0xff]
  %v63 = vld [vmem:[%s0 + $0x178] sm:$0xff]
  %v64 = vld [vmem:[%s0 + $0x180] sm:$0xff]
  %v65 = vld [vmem:[%s0 + $0x188] sm:$0xff]
  %v66 = vld [vmem:[%s0 + $0x190] sm:$0xff]
  %v67 = vld [vmem:[%s0 + $0x198] sm:$0xff]
  %v68 = vld [vmem:[%s0 + $0x1a0] sm:$0xff]
  %v69 = vld [vmem:[%s0 + $0x1a8] sm:$0xff]
  %v70 = vld [vmem:[%s0 + $0x1b0] sm:$0xff]
  %v71 = vld [vmem:[%s0 + $0x1b8] sm:$0xff]
  %v72 = vld [vmem:[%s0 + $0x1c0] sm:$0xff]
  %v73 = vld [vmem:[%s0 + $0x1c8] sm:$0xff]
  %v74 = vld [vmem:[%s0 + $0x1d0] sm:$0xff]
  %v75 = vld [vmem:[%s0 + $0x1d8] sm:$0xff]
  %v76 = vld [vmem:[%s0 + $0x1e0] sm:$0xff]
  %v77 = vld [vmem:[%s0 + $0x1e8] sm:$0xff]
  %v78 = vld [vmem:[%s0 + $0x1f0] sm:$0xff]
  %v79 = vld [vmem:[%s0 + $0x1f8] sm:$0xff]
  %v81 = vlaneseq
  %v82 = vshrl.u32 %v81, 7
  %v83 = vsub.s32 0, %v82
  %v84 = vrot.slane %v14, %v83
  %v86 = vmul.f32 %v16, %v84
  %v87 = vmul.f32 %v17, %v84
  %v88 = vmul.f32 %v18, %v84
  %v89 = vmul.f32 %v19, %v84
  %v90 = vmul.f32 %v20, %v84
  %v91 = vmul.f32 %v21, %v84
  %v92 = vmul.f32 %v22, %v84
  %v93 = vmul.f32 %v23, %v84
  %v94 = vmul.f32 %v24, %v84
  %v95 = vmul.f32 %v25, %v84
  %v96 = vmul.f32 %v26, %v84
  %v97 = vmul.f32 %v27, %v84
  %v98 = vmul.f32 %v28, %v84
  %v99 = vmul.f32 %v29, %v84
  %v100 = vmul.f32 %v30, %v84
  %v101 = vmul.f32 %v31, %v84
  %v102 = vmul.f32 %v32, %v84
  %v103 = vmul.f32 %v33, %v84
  %v104 = vmul.f32 %v34, %v84
  %v105 = vmul.f32 %v35, %v84
  %v106 = vmul.f32 %v36, %v84
  %v107 = vmul.f32 %v37, %v84
  %v108 = vmul.f32 %v38, %v84
  %v109 = vmul.f32 %v39, %v84
  %v110 = vmul.f32 %v40, %v84
  %v111 = vmul.f32 %v41, %v84
  %v112 = vmul.f32 %v42, %v84
  %v113 = vmul.f32 %v43, %v84
  %v114 = vmul.f32 %v44, %v84
  %v115 = vmul.f32 %v45, %v84
  %v116 = vmul.f32 %v46, %v84
  %v117 = vmul.f32 %v47, %v84
  %v118 = vmul.f32 %v48, %v84
  %v119 = vmul.f32 %v49, %v84
  %v120 = vmul.f32 %v50, %v84
  %v121 = vmul.f32 %v51, %v84
  %v122 = vmul.f32 %v52, %v84
  %v123 = vmul.f32 %v53, %v84
  %v124 = vmul.f32 %v54, %v84
  %v125 = vmul.f32 %v55, %v84
  %v126 = vmul.f32 %v56, %v84
  %v127 = vmul.f32 %v57, %v84
  %v128 = vmul.f32 %v58, %v84
  %v129 = vmul.f32 %v59, %v84
  %v130 = vmul.f32 %v60, %v84
  %v131 = vmul.f32 %v61, %v84
  %v132 = vmul.f32 %v62, %v84
  %v133 = vmul.f32 %v63, %v84
  %v134 = vmul.f32 %v64, %v84
  %v135 = vmul.f32 %v65, %v84
  %v136 = vmul.f32 %v66, %v84
  %v137 = vmul.f32 %v67, %v84
  %v138 = vmul.f32 %v68, %v84
  %v139 = vmul.f32 %v69, %v84
  %v140 = vmul.f32 %v70, %v84
  %v141 = vmul.f32 %v71, %v84
  %v142 = vmul.f32 %v72, %v84
  %v143 = vmul.f32 %v73, %v84
  %v144 = vmul.f32 %v74, %v84
  %v145 = vmul.f32 %v75, %v84
  %v146 = vmul.f32 %v76, %v84
  %v147 = vmul.f32 %v77, %v84
  %v148 = vmul.f32 %v78, %v84
  %v149 = vmul.f32 %v79, %v84
  %v151 = vlaneseq
  %v152 = vshrl.u32 %v151, 7
  %v153 = vsub.s32 0, %v152
  %v154 = vrot.slane %v15, %v153
  %v156 = vadd.f32 %v86, %v154
  %v157 = vadd.f32 %v87, %v154
  %v158 = vadd.f32 %v88, %v154
  %v159 = vadd.f32 %v89, %v154
  %v160 = vadd.f32 %v90, %v154
  %v161 = vadd.f32 %v91, %v154
  %v162 = vadd.f32 %v92, %v154
  %v163 = vadd.f32 %v93, %v154
  %v164 = vadd.f32 %v94, %v154
  %v165 = vadd.f32 %v95, %v154
  %v166 = vadd.f32 %v96, %v154
  %v167 = vadd.f32 %v97, %v154
  %v168 = vadd.f32 %v98, %v154
  %v169 = vadd.f32 %v99, %v154
  %v170 = vadd.f32 %v100, %v154
  %v171 = vadd.f32 %v101, %v154
  %v172 = vadd.f32 %v102, %v154
  %v173 = vadd.f32 %v103, %v154
  %v174 = vadd.f32 %v104, %v154
  %v175 = vadd.f32 %v105, %v154
  %v176 = vadd.f32 %v106, %v154
  %v177 = vadd.f32 %v107, %v154
  %v178 = vadd.f32 %v108, %v154
  %v179 = vadd.f32 %v109, %v154
  %v180 = vadd.f32 %v110, %v154
  %v181 = vadd.f32 %v111, %v154
  %v182 = vadd.f32 %v112, %v154
  %v183 = vadd.f32 %v113, %v154
  %v184 = vadd.f32 %v114, %v154
  %v185 = vadd.f32 %v115, %v154
  %v186 = vadd.f32 %v116, %v154
  %v187 = vadd.f32 %v117, %v154
  %v188 = vadd.f32 %v118, %v154
  %v189 = vadd.f32 %v119, %v154
  %v190 = vadd.f32 %v120, %v154
  %v191 = vadd.f32 %v121, %v154
  %v192 = vadd.f32 %v122, %v154
  %v193 = vadd.f32 %v123, %v154
  %v194 = vadd.f32 %v124, %v154
  %v195 = vadd.f32 %v125, %v154
  %v196 = vadd.f32 %v126, %v154
  %v197 = vadd.f32 %v127, %v154
  %v198 = vadd.f32 %v128, %v154
  %v199 = vadd.f32 %v129, %v154
  %v200 = vadd.f32 %v130, %v154
  %v201 = vadd.f32 %v131, %v154
  %v202 = vadd.f32 %v132, %v154
  %v203 = vadd.f32 %v133, %v154
  %v204 = vadd.f32 %v134, %v154
  %v205 = vadd.f32 %v135, %v154
  %v206 = vadd.f32 %v136, %v154
  %v207 = vadd.f32 %v137, %v154
  %v208 = vadd.f32 %v138, %v154
  %v209 = vadd.f32 %v139, %v154
  %v210 = vadd.f32 %v140, %v154
  %v211 = vadd.f32 %v141, %v154
  %v212 = vadd.f32 %v142, %v154
  %v213 = vadd.f32 %v143, %v154
  %v214 = vadd.f32 %v144, %v154
  %v215 = vadd.f32 %v145, %v154
  %v216 = vadd.f32 %v146, %v154
  %v217 = vadd.f32 %v147, %v154
  %v218 = vadd.f32 %v148, %v154
  %v219 = vadd.f32 %v149, %v154
  %v220 = vmax.f32 %v156, 0.0
  %v221 = vmax.f32 %v157, 0.0
  %v222 = vmax.f32 %v158, 0.0
  %v223 = vmax.f32 %v159, 0.0
  %v224 = vmax.f32 %v160, 0.0
  %v225 = vmax.f32 %v161, 0.0
  %v226 = vmax.f32 %v162, 0.0
  %v227 = vmax.f32 %v163, 0.0
  %v228 = vmax.f32 %v164, 0.0
  %v229 = vmax.f32 %v165, 0.0
  %v230 = vmax.f32 %v166, 0.0
  %v231 = vmax.f32 %v167, 0.0
  %v232 = vmax.f32 %v168, 0.0
  %v233 = vmax.f32 %v169, 0.0
  %v234 = vmax.f32 %v170, 0.0
  %v235 = vmax.f32 %v171, 0.0
  %v236 = vmax.f32 %v172, 0.0
  %v237 = vmax.f32 %v173, 0.0
  %v238 = vmax.f32 %v174, 0.0
  %v239 = vmax.f32 %v175, 0.0
  %v240 = vmax.f32 %v176, 0.0
  %v241 = vmax.f32 %v177, 0.0
  %v242 = vmax.f32 %v178, 0.0
  %v243 = vmax.f32 %v179, 0.0
  %v244 = vmax.f32 %v180, 0.0
  %v245 = vmax.f32 %v181, 0.0
  %v246 = vmax.f32 %v182, 0.0
  %v247 = vmax.f32 %v183, 0.0
  %v248 = vmax.f32 %v184, 0.0
  %v249 = vmax.f32 %v185, 0.0
  %v250 = vmax.f32 %v186, 0.0
  %v251 = vmax.f32 %v187, 0.0
  %v252 = vmax.f32 %v188, 0.0
  %v253 = vmax.f32 %v189, 0.0
  %v254 = vmax.f32 %v190, 0.0
  %v255 = vmax.f32 %v191, 0.0
  %v256 = vmax.f32 %v192, 0.0
  %v257 = vmax.f32 %v193, 0.0
  %v258 = vmax.f32 %v194, 0.0
  %v259 = vmax.f32 %v195, 0.0
  %v260 = vmax.f32 %v196, 0.0
  %v261 = vmax.f32 %v197, 0.0
  %v262 = vmax.f32 %v198, 0.0
  %v263 = vmax.f32 %v199, 0.0
  %v264 = vmax.f32 %v200, 0.0
  %v265 = vmax.f32 %v201, 0.0
  %v266 = vmax.f32 %v202, 0.0
  %v267 = vmax.f32 %v203, 0.0
  %v268 = vmax.f32 %v204, 0.0
  %v269 = vmax.f32 %v205, 0.0
  %v270 = vmax.f32 %v206, 0.0
  %v271 = vmax.f32 %v207, 0.0
  %v272 = vmax.f32 %v208, 0.0
  %v273 = vmax.f32 %v209, 0.0
  %v274 = vmax.f32 %v210, 0.0
  %v275 = vmax.f32 %v211, 0.0
  %v276 = vmax.f32 %v212, 0.0
  %v277 = vmax.f32 %v213, 0.0
  %v278 = vmax.f32 %v214, 0.0
  %v279 = vmax.f32 %v215, 0.0
  %v280 = vmax.f32 %v216, 0.0
  %v281 = vmax.f32 %v217, 0.0
  %v282 = vmax.f32 %v218, 0.0
  %v283 = vmax.f32 %v219, 0.0
  %v284 = vadd.f32 %v220, %v236
  %v285 = vadd.f32 %v221, %v237
  %v286 = vadd.f32 %v222, %v238
  %v287 = vadd.f32 %v223, %v239
  %v288 = vadd.f32 %v224, %v240
  %v289 = vadd.f32 %v225, %v241
  %v290 = vadd.f32 %v226, %v242
  %v291 = vadd.f32 %v227, %v243
  %v292 = vadd.f32 %v228, %v244
  %v293 = vadd.f32 %v229, %v245
  %v294 = vadd.f32 %v230, %v246
  %v295 = vadd.f32 %v231, %v247
  %v296 = vadd.f32 %v232, %v248
  %v297 = vadd.f32 %v233, %v249
  %v298 = vadd.f32 %v234, %v250
  %v299 = vadd.f32 %v235, %v251
  %v300 = vadd.f32 %v252, %v268
  %v301 = vadd.f32 %v253, %v269
  %v302 = vadd.f32 %v254, %v270
  %v303 = vadd.f32 %v255, %v271
  %v304 = vadd.f32 %v256, %v272
  %v305 = vadd.f32 %v257, %v273
  %v306 = vadd.f32 %v258, %v274
  %v307 = vadd.f32 %v259, %v275
  %v308 = vadd.f32 %v260, %v276
  %v309 = vadd.f32 %v261, %v277
  %v310 = vadd.f32 %v262, %v278
  %v311 = vadd.f32 %v263, %v279
  %v312 = vadd.f32 %v264, %v280
  %v313 = vadd.f32 %v265, %v281
  %v314 = vadd.f32 %v266, %v282
  %v315 = vadd.f32 %v267, %v283
  %v316 = vadd.f32 %v284, %v300
  %v317 = vadd.f32 %v285, %v301
  %v318 = vadd.f32 %v286, %v302
  %v319 = vadd.f32 %v287, %v303
  %v320 = vadd.f32 %v288, %v304
  %v321 = vadd.f32 %v289, %v305
  %v322 = vadd.f32 %v290, %v306
  %v323 = vadd.f32 %v291, %v307
  %v324 = vadd.f32 %v292, %v308
  %v325 = vadd.f32 %v293, %v309
  %v326 = vadd.f32 %v294, %v310
  %v327 = vadd.f32 %v295, %v311
  %v328 = vadd.f32 %v296, %v312
  %v329 = vadd.f32 %v297, %v313
  %v330 = vadd.f32 %v298, %v314
  %v331 = vadd.f32 %v299, %v315
  %v332 = vld [vmem:[%s2] sm:$0xf]
  %vm333 = vcmask 31744
  %v335 = vsel %vm333, %v316, 0
  %v338 = vsel %vm333, %v317, 0
  %v341 = vsel %vm333, %v318, 0
  %v344 = vsel %vm333, %v319, 0
  %v347 = vsel %vm333, %v320, 0
  %v350 = vsel %vm333, %v321, 0
  %v353 = vsel %vm333, %v322, 0
  %v356 = vsel %vm333, %v323, 0
  %v359 = vsel %vm333, %v324, 0
  %v362 = vsel %vm333, %v325, 0
  %v365 = vsel %vm333, %v326, 0
  %v368 = vsel %vm333, %v327, 0
  %v371 = vsel %vm333, %v328, 0
  %v374 = vsel %vm333, %v329, 0
  %v377 = vsel %vm333, %v330, 0
  %v380 = vsel %vm333, %v331, 0
  %vm382 = vcmask 1043456
  %v384 = vsel %vm382, %v332, 0
  %386 = vmatprep.subr.mxu0 0.0
  %387 = vmatpush1.msra.mxu0 %v384
  %388 = vmatprep.subr.mxu0 0.0
  %389 = vmatpush1.msra.mxu0 0.0
  %390 = vmatprep.subr.mxu0 0.0
  %391 = vmatpush1.msra.mxu0 0.0
  %392 = vmatprep.subr.mxu0 0.0
  %393 = vmatpush1.msra.mxu0 0.0
  %394 = vmatprep.subr.mxu0 0.0
  %395 = vmatpush1.msra.mxu0 0.0
  %396 = vmatprep.subr.mxu0 0.0
  %397 = vmatpush1.msra.mxu0 0.0
  %398 = vmatprep.subr.mxu0 0.0
  %399 = vmatpush1.msra.mxu0 0.0
  %400 = vmatprep.subr.mxu0 0.0
  %401 = vmatpush1.msra.mxu0 0.0
  %402 = vmatprep.subr.mxu0 0.0
  %403 = vmatpush1.msra.mxu0 0.0
  %404 = vmatprep.subr.mxu0 0.0
  %405 = vmatpush1.msra.mxu0 0.0
  %406 = vmatprep.subr.mxu0 0.0
  %407 = vmatpush1.msra.mxu0 0.0
  %408 = vmatprep.subr.mxu0 0.0
  %409 = vmatpush1.msra.mxu0 0.0
  %410 = vmatprep.subr.mxu0 0.0
  %411 = vmatpush1.msra.mxu0 0.0
  %412 = vmatprep.subr.mxu0 0.0
  %413 = vmatpush1.msra.mxu0 0.0
  %414 = vmatprep.subr.mxu0 0.0
  %415 = vmatpush1.msra.mxu0 0.0
  %416 = vmatprep.subr.mxu0 0.0
  %417 = vmatpush1.msra.mxu0 0.0
  %418 = vmatprep.subr.mxu0 0.0
  %419 = vmatpush1.msra.mxu0 0.0
  %420 = vmatprep.subr.mxu0 0.0
  %421 = vmatpush1.msra.mxu0 0.0
  %422 = vmatprep.subr.mxu0 0.0
  %423 = vmatpush1.msra.mxu0 0.0
  %424 = vmatprep.subr.mxu0 0.0
  %425 = vmatpush1.msra.mxu0 0.0
  %426 = vmatprep.subr.mxu0 0.0
  %427 = vmatpush1.msra.mxu0 0.0
  %428 = vmatprep.subr.mxu0 0.0
  %429 = vmatpush1.msra.mxu0 0.0
  %430 = vmatprep.subr.mxu0 0.0
  %431 = vmatpush1.msra.mxu0 0.0
  %432 = vmatprep.subr.mxu0 0.0
  %433 = vmatpush1.msra.mxu0 0.0
  %434 = vmatprep.subr.mxu0 0.0
  %435 = vmatpush1.msra.mxu0 0.0
  %436 = vmatprep.subr.mxu0 0.0
  %437 = vmatpush1.msra.mxu0 0.0
  %438 = vmatprep.subr.mxu0 0.0
  %439 = vmatpush1.msra.mxu0 0.0
  %440 = vmatprep.subr.mxu0 0.0
  %441 = vmatpush1.msra.mxu0 0.0
  %442 = vmatprep.subr.mxu0 0.0
  %443 = vmatpush1.msra.mxu0 0.0
  %444 = vmatprep.subr.mxu0 0.0
  %445 = vmatpush1.msra.mxu0 0.0
  %446 = vmatprep.subr.mxu0 0.0
  %447 = vmatpush1.msra.mxu0 0.0
  %448 = vmatprep.subr.mxu0 0.0
  %449 = vmatpush1.msra.mxu0 0.0
  %450 = vmatprep.mubr.f32.mxu0 0.0
  %451 = vmatmul.mubr.f32.gmra.mrb[0].mxu0 %v335
  %v452 = vpop.f32.mrb[0].mxu0
  %v453 = vadd.f32 0.0, %v452
  %v454 = vpop.f32.mrb[0].mxu0
  %455 = vmatprep.mubr.f32.mxu0 0.0
  %456 = vmatmul.mubr.f32.gmra.mrb[0].mxu0 %v338
  %v457 = vpop.f32.mrb[0].mxu0
  %v458 = vadd.f32 0.0, %v457
  %v459 = vpop.f32.mrb[0].mxu0
  %460 = vmatprep.mubr.f32.mxu0 0.0
  %461 = vmatmul.mubr.f32.gmra.mrb[0].mxu0 %v341
  %v462 = vpop.f32.mrb[0].mxu0
  %v463 = vadd.f32 0.0, %v462
  %v464 = vpop.f32.mrb[0].mxu0
  %465 = vmatprep.mubr.f32.mxu0 0.0
  %466 = vmatmul.mubr.f32.gmra.mrb[0].mxu0 %v344
  %v467 = vpop.f32.mrb[0].mxu0
  %v468 = vadd.f32 0.0, %v467
  %v469 = vpop.f32.mrb[0].mxu0
  %470 = vmatprep.mubr.f32.mxu0 0.0
  %471 = vmatmul.mubr.f32.gmra.mrb[0].mxu0 %v347
  %v472 = vpop.f32.mrb[0].mxu0
  %v473 = vadd.f32 0.0, %v472
  %v474 = vpop.f32.mrb[0].mxu0
  %475 = vmatprep.mubr.f32.mxu0 0.0
  %476 = vmatmul.mubr.f32.gmra.mrb[0].mxu0 %v350
  %v477 = vpop.f32.mrb[0].mxu0
  %v478 = vadd.f32 0.0, %v477
  %v479 = vpop.f32.mrb[0].mxu0
  %480 = vmatprep.mubr.f32.mxu0 0.0
  %481 = vmatmul.mubr.f32.gmra.mrb[0].mxu0 %v353
  %v482 = vpop.f32.mrb[0].mxu0
  %v483 = vadd.f32 0.0, %v482
  %v484 = vpop.f32.mrb[0].mxu0
  %485 = vmatprep.mubr.f32.mxu0 0.0
  %486 = vmatmul.mubr.f32.gmra.mrb[0].mxu0 %v356
  %v487 = vpop.f32.mrb[0].mxu0
  %v488 = vadd.f32 0.0, %v487
  %v489 = vpop.f32.mrb[0].mxu0
  %490 = vmatprep.mubr.f32.mxu0 0.0
  %491 = vmatmul.mubr.f32.gmra.mrb[0].mxu0 %v359
  %v492 = vpop.f32.mrb[0].mxu0
  %v493 = vadd.f32 0.0, %v492
  %v494 = vpop.f32.mrb[0].mxu0
  %495 = vmatprep.mubr.f32.mxu0 0.0
  %496 = vmatmul.mubr.f32.gmra.mrb[0].mxu0 %v362
  %v497 = vpop.f32.mrb[0].mxu0
  %v498 = vadd.f32 0.0, %v497
  %v499 = vpop.f32.mrb[0].mxu0
  %500 = vmatprep.mubr.f32.mxu0 0.0
  %501 = vmatmul.mubr.f32.gmra.mrb[0].mxu0 %v365
  %v502 = vpop.f32.mrb[0].mxu0
  %v503 = vadd.f32 0.0, %v502
  %v504 = vpop.f32.mrb[0].mxu0
  %505 = vmatprep.mubr.f32.mxu0 0.0
  %506 = vmatmul.mubr.f32.gmra.mrb[0].mxu0 %v368
  %v507 = vpop.f32.mrb[0].mxu0
  %v508 = vadd.f32 0.0, %v507
  %v509 = vpop.f32.mrb[0].mxu0
  %510 = vmatprep.mubr.f32.mxu0 0.0
  %511 = vmatmul.mubr.f32.gmra.mrb[0].mxu0 %v371
  %v512 = vpop.f32.mrb[0].mxu0
  %v513 = vadd.f32 0.0, %v512
  %v514 = vpop.f32.mrb[0].mxu0
  %515 = vmatprep.mubr.f32.mxu0 0.0
  %516 = vmatmul.mubr.f32.gmra.mrb[0].mxu0 %v374
  %v517 = vpop.f32.mrb[0].mxu0
  %v518 = vadd.f32 0.0, %v517
  %v519 = vpop.f32.mrb[0].mxu0
  %520 = vmatprep.mubr.f32.mxu0 0.0
  %521 = vmatmul.mubr.f32.gmra.mrb[0].mxu0 %v377
  %v522 = vpop.f32.mrb[0].mxu0
  %v523 = vadd.f32 0.0, %v522
  %v524 = vpop.f32.mrb[0].mxu0
  %525 = vmatprep.mubr.f32.mxu0 0.0
  %526 = vmatmul.mubr.f32.gmra.mrb[0].mxu0 %v380
  %v527 = vpop.f32.mrb[0].mxu0
  %v528 = vadd.f32 0.0, %v527
  %v529 = vpop.f32.mrb[0].mxu0
  %530 = vdwg.mxu0
  %vm531 = vcmask 64512
  %532 = vst.msk [vmem:[%s3] sm:$0xff] %vm531, %v453
  %533 = vst.msk [vmem:[%s3 + $0x8] sm:$0xff] %vm531, %v458
  %534 = vst.msk [vmem:[%s3 + $0x10] sm:$0xff] %vm531, %v463
  %535 = vst.msk [vmem:[%s3 + $0x18] sm:$0xff] %vm531, %v468
  %536 = vst.msk [vmem:[%s3 + $0x20] sm:$0xff] %vm531, %v473
  %537 = vst.msk [vmem:[%s3 + $0x28] sm:$0xff] %vm531, %v478
  %538 = vst.msk [vmem:[%s3 + $0x30] sm:$0xff] %vm531, %v483
  %539 = vst.msk [vmem:[%s3 + $0x38] sm:$0xff] %vm531, %v488
  %540 = vst.msk [vmem:[%s3 + $0x40] sm:$0xff] %vm531, %v493
  %541 = vst.msk [vmem:[%s3 + $0x48] sm:$0xff] %vm531, %v498
  %542 = vst.msk [vmem:[%s3 + $0x50] sm:$0xff] %vm531, %v503
  %543 = vst.msk [vmem:[%s3 + $0x58] sm:$0xff] %vm531, %v508
  %544 = vst.msk [vmem:[%s3 + $0x60] sm:$0xff] %vm531, %v513
  %545 = vst.msk [vmem:[%s3 + $0x68] sm:$0xff] %vm531, %v518
  %546 = vst.msk [vmem:[%s3 + $0x70] sm:$0xff] %vm531, %v523
  %547 = vst.msk [vmem:[%s3 + $0x78] sm:$0xff] %vm531, %v528
  // Predicated region
  $region14: #{tpu_custom_call.1} parent=0 // pred_check
    _
  $region15: #{tpu_custom_call.1} parent=0 // pred_check_branch
    %549 = sbr.rel (0) target = $region17
  $region16: #{tpu_custom_call.1} parent=0 // pred_region
    _
  $region17: #{tpu_custom_call.1} parent=0 // pred_fallthru
    _
  // Predicated region
  $region18: #{tpu_custom_call.1} parent=0 // pred_check
    _
  $region19: #{tpu_custom_call.1} parent=0 // pred_check_branch
    %551 = sbr.rel (0) target = $region21
  $region20: #{tpu_custom_call.1} parent=0 // pred_region
    _
  $region21: #{tpu_custom_call.1} parent=0 // pred_fallthru
    _

</llo_original>
